<compile_context>
chip_gen: v7x
topology: tpu7x:2x2x1
jax: 0.10.0
libtpu: 0.0.40
codegen_flags: <defaults>
</compile_context>

<pallas_src>
import math

import jax
import jax.numpy as jnp
from jax.experimental import pallas as pl
from jax.experimental.pallas import tpu as pltpu


def _round_up(x, m):
    return ((x + m - 1) // m) * m


def _nac_fused_kernel(x_ref, w_hat_ref, m_hat_ref, o_ref, act_ref):
    """Grid = (batch_tiles, n_layers); layer axis innermost ("arbitrary").

    x_ref      : (tm, D)      current batch tile (fetched once per tile)
    w_hat_ref  : (1, D, D)    this layer's w_hat, pre-transposed to (in, out)
    m_hat_ref  : (1, D, D)    this layer's m_hat, pre-transposed to (in, out)
    o_ref      : (tm, D)      output tile (written on the last layer)
    act_ref    : (tm, D) f32  VMEM-resident activation carried across layers
    """
    layer = pl.program_id(1)

    @pl.when(layer == 0)
    def _():
        act_ref[...] = x_ref[...].astype(jnp.float32)

    w_hat = w_hat_ref[0]
    m_hat = m_hat_ref[0]
    # sigmoid(m) = 0.5 * (tanh(0.5*m) + 1): shares the EUP tanh path with the
    # w_hat gate instead of spending a separate logistic (exp + recip).
    gate = jnp.tanh(w_hat) * (0.5 * jnp.tanh(0.5 * m_hat) + 0.5)

    # Plain x @ w (weights already in (in, out) layout) -> MXU, no transpose.
    y = jnp.dot(act_ref[...], gate, preferred_element_type=jnp.float32)
    act_ref[...] = y

    @pl.when(layer == pl.num_programs(1) - 1)
    def _():
        o_ref[...] = y.astype(o_ref.dtype)


def nac_forward(x, params):
    """Fused NAC forward: all NeuralAccumulatorCells in one Pallas kernel.

    x:      (batch, in_dim) float32
    params: list of (w_hat, m_hat), each (out_dim_l, in_dim_l) — PyTorch layout.
    """
    batch, in_dim = x.shape
    n_layers = len(params)
    assert n_layers >= 1

    # Common padded feature width D (multiple of 128) covering every layer.
    dims = [in_dim] + [w.shape[0] for (w, _) in params]
    D = max(_round_up(d, 128) for d in dims)

    # Batch tiling: tile size tm (multiple of 8), batch padded to multiple of tm.
    if batch <= 256:
        B = _round_up(batch, 8)
        tm = B
    else:
        tm = 256
        B = _round_up(batch, tm)

    # Pad + pre-transpose weights into stacked (L, D, D) arrays, (in, out) layout.
    # Zero padding is exact: gate(0, 0) = tanh(0) * sigmoid(0) = 0.
    w_stack = jnp.zeros((n_layers, D, D), jnp.float32)
    m_stack = jnp.zeros((n_layers, D, D), jnp.float32)
    for l, (w_hat, m_hat) in enumerate(params):
        od, idim = w_hat.shape
        assert m_hat.shape == (od, idim)
        w_stack = w_stack.at[l, :idim, :od].set(w_hat.T.astype(jnp.float32))
        m_stack = m_stack.at[l, :idim, :od].set(m_hat.T.astype(jnp.float32))

    x_p = jnp.zeros((B, D), x.dtype).at[:batch, :in_dim].set(x)

    grid = (B // tm, n_layers)

    out_p = pl.pallas_call(
        _nac_fused_kernel,
        out_shape=jax.ShapeDtypeStruct((B, D), x.dtype),
        grid_spec=pltpu.PrefetchScalarGridSpec(
            num_scalar_prefetch=0,
            grid=grid,
            in_specs=[
                # x tile: constant across the layer axis -> fetched once per tile.
                pl.BlockSpec((tm, D), lambda b, l: (b, 0)),
                # per-layer weights: pipelined along the layer axis.
                pl.BlockSpec((1, D, D), lambda b, l: (l, 0, 0)),
                pl.BlockSpec((1, D, D), lambda b, l: (l, 0, 0)),
            ],
            # Output block constant across the layer axis -> VMEM resident,
            # written back once per batch tile.
            out_specs=pl.BlockSpec((tm, D), lambda b, l: (b, 0)),
            scratch_shapes=[pltpu.VMEM((tm, D), jnp.float32)],
        ),
        compiler_params=pltpu.CompilerParams(
            # batch tiles are independent (megacore-shardable); layer axis
            # carries the activation -> arbitrary.
            dimension_semantics=("parallel", "arbitrary"),
        ),
    )(x_p, w_stack, m_stack)

    out_dim = params[-1][0].shape[0]
    return out_p[:batch, :out_dim]


# TODO(synk): for very large hidden dims, tile D with a K-reduction grid axis
# (float32 accumulator + pl.when init/finalize) instead of one D x D block.


def _kaiming_uniform(key, shape):
    # torch.nn.init.kaiming_uniform_ defaults: fan_in, a=0 -> bound = sqrt(6/fan_in)
    fan_in = shape[1]
    bound = math.sqrt(6.0 / fan_in)
    return jax.random.uniform(key, shape, jnp.float32, -bound, bound)


def init_nac_params(key, in_dim, hidden_dim, out_dim, n_layers):
    """Parameter init mirroring NAC.__init__ shapes (PyTorch (out, in) layout)."""
    params = []
    for i in range(n_layers):
        layer_in = hidden_dim if i > 0 else in_dim
        layer_out = hidden_dim if i < n_layers - 1 else out_dim
        key, kw, km = jax.random.split(key, 3)
        w_hat = _kaiming_uniform(kw, (layer_out, layer_in))
        m_hat = _kaiming_uniform(km, (layer_out, layer_in))
        params.append((w_hat, m_hat))
    return params


def nac_forward_ref(x, params):
    """Pure-JAX reference (matches the PyTorch forward exactly)."""
    out = x
    for w_hat, m_hat in params:
        w = jnp.tanh(w_hat) * jax.nn.sigmoid(m_hat)
        out = out @ w.T
    return out


if __name__ == "__main__":
    # Small shapes consistent with the module.
    batch, in_dim, hidden_dim, out_dim, n_layers = 8, 16, 32, 8, 3

    key = jax.random.PRNGKey(0)
    key, kx = jax.random.split(key)
    x = jax.random.normal(kx, (batch, in_dim), dtype=jnp.float32)
    params = init_nac_params(key, in_dim, hidden_dim, out_dim, n_layers)

    y = nac_forward(x, params)
    y = jax.block_until_ready(y)

    y_ref = nac_forward_ref(x, params)
    assert y.shape == (batch, out_dim), y.shape
    assert jnp.allclose(y, y_ref, atol=1e-4, rtol=1e-5), (
        float(jnp.max(jnp.abs(y - y_ref)))
    )

    print("KERNEL_OK")
</pallas_src>

<mosaic_0001>
module attributes {stable_mosaic.version = 11 : i64} {
  func.func @_nac_fused_kernel(%arg0: i32, %arg1: i32, %arg2: memref<8x128xf32, #tpu.memory_space<vmem>>, %arg3: memref<1x128x128xf32, #tpu.memory_space<vmem>>, %arg4: memref<1x128x128xf32, #tpu.memory_space<vmem>>, %arg5: memref<8x128xf32, #tpu.memory_space<vmem>>, %arg6: memref<8x128xf32, #tpu.memory_space<vmem>>) attributes {dimension_semantics = [#tpu.dimension_semantics<parallel>, #tpu.dimension_semantics<arbitrary>], iteration_bounds = array<i64: 1, 3>, scalar_prefetch = 0 : i64, scratch_operands = 1 : i64, tpu.core_type = #tpu.core_type<tc>, window_params = [{transform_indices = @transform_0, window_bounds = array<i64: 8, 128>}, {transform_indices = @transform_1, window_bounds = array<i64: 1, 128, 128>}, {transform_indices = @transform_2, window_bounds = array<i64: 1, 128, 128>}, {transform_indices = @transform_3, window_bounds = array<i64: 8, 128>}]} {
    %c0_i32 = arith.constant 0 : i32
    %0 = arith.cmpi eq, %arg1, %c0_i32 : i32
    %1 = arith.extui %0 : i1 to i32
    %c0_i32_0 = arith.constant 0 : i32
    %2 = arith.cmpi ne, %1, %c0_i32_0 : i32
    scf.if %2 {
      %c0_14 = arith.constant 0 : index
      %c0_15 = arith.constant 0 : index
      %22 = vector.load %arg2[%c0_14, %c0_15] : memref<8x128xf32, #tpu.memory_space<vmem>>, vector<8x128xf32>
      %c0_16 = arith.constant 0 : index
      %c0_17 = arith.constant 0 : index
      %23 = vector.load %arg6[%c0_16, %c0_17] : memref<8x128xf32, #tpu.memory_space<vmem>>, vector<8x128xf32>
      tpu.vector_store %arg6[%c0_16, %c0_17], %22 {strides = array<i32>} : memref<8x128xf32, #tpu.memory_space<vmem>>, vector<8x128xf32>,
    } else {
    }
    %c0 = arith.constant 0 : index
    %c0_1 = arith.constant 0 : index
    %c0_2 = arith.constant 0 : index
    %3 = vector.load %arg3[%c0, %c0_1, %c0_2] : memref<1x128x128xf32, #tpu.memory_space<vmem>>, vector<1x128x128xf32>
    %4 = vector.shape_cast %3 : vector<1x128x128xf32> to vector<128x128xf32>
    %c0_3 = arith.constant 0 : index
    %c0_4 = arith.constant 0 : index
    %c0_5 = arith.constant 0 : index
    %5 = vector.load %arg4[%c0_3, %c0_4, %c0_5] : memref<1x128x128xf32, #tpu.memory_space<vmem>>, vector<1x128x128xf32>
    %6 = vector.shape_cast %5 : vector<1x128x128xf32> to vector<128x128xf32>
    %7 = math.tanh %4 : vector<128x128xf32>
    %cst = arith.constant 5.000000e-01 : f32
    %8 = vector.broadcast %cst : f32 to vector<128x128xf32>
    %9 = arith.mulf %8, %6 : vector<128x128xf32>
    %10 = math.tanh %9 : vector<128x128xf32>
    %cst_6 = arith.constant 5.000000e-01 : f32
    %11 = vector.broadcast %cst_6 : f32 to vector<128x128xf32>
    %12 = arith.mulf %11, %10 : vector<128x128xf32>
    %cst_7 = arith.constant 5.000000e-01 : f32
    %13 = vector.broadcast %cst_7 : f32 to vector<128x128xf32>
    %14 = arith.addf %12, %13 : vector<128x128xf32>
    %15 = arith.mulf %7, %14 : vector<128x128xf32>
    %c0_8 = arith.constant 0 : index
    %c0_9 = arith.constant 0 : index
    %16 = vector.load %arg6[%c0_8, %c0_9] : memref<8x128xf32, #tpu.memory_space<vmem>>, vector<8x128xf32>
    %cst_10 = arith.constant dense<0.000000e+00> : vector<8x128xf32>
    %17 = tpu.matmul %16, %15, %cst_10 {dimension_numbers = #tpu.dot_dimension_numbers<[1], [0], [0], [1], [0, 0, 1, 1], [], []>} : vector<8x128xf32>, vector<128x128xf32>, vector<8x128xf32> -> vector<8x128xf32>
    %c0_11 = arith.constant 0 : index
    %c0_12 = arith.constant 0 : index
    %18 = vector.load %arg6[%c0_11, %c0_12] : memref<8x128xf32, #tpu.memory_space<vmem>>, vector<8x128xf32>
    tpu.vector_store %arg6[%c0_11, %c0_12], %17 {strides = array<i32>} : memref<8x128xf32, #tpu.memory_space<vmem>>, vector<8x128xf32>,
    %c2_i32 = arith.constant 2 : i32
    %19 = arith.cmpi eq, %arg1, %c2_i32 : i32
    %20 = arith.extui %19 : i1 to i32
    %c0_i32_13 = arith.constant 0 : i32
    %21 = arith.cmpi ne, %20, %c0_i32_13 : i32
    scf.if %21 {
      %c0_14 = arith.constant 0 : index
      %c0_15 = arith.constant 0 : index
      %22 = vector.load %arg5[%c0_14, %c0_15] : memref<8x128xf32, #tpu.memory_space<vmem>>, vector<8x128xf32>
      tpu.vector_store %arg5[%c0_14, %c0_15], %17 {strides = array<i32>} : memref<8x128xf32, #tpu.memory_space<vmem>>, vector<8x128xf32>,
    } else {
    }
    return
  }
  func.func @transform_0(%arg0: i32, %arg1: i32) -> (i32, i32) {
    %c0_i32 = arith.constant 0 : i32
    %c0_i32_0 = arith.constant 0 : i32
    return %arg0, %c0_i32 : i32, i32
  }
  func.func @transform_1(%arg0: i32, %arg1: i32) -> (i32, i32, i32) {
    %c0_i32 = arith.constant 0 : i32
    %c0_i32_0 = arith.constant 0 : i32
    %c0_i32_1 = arith.constant 0 : i32
    return %arg1, %c0_i32, %c0_i32_0 : i32, i32, i32
  }
  func.func @transform_2(%arg0: i32, %arg1: i32) -> (i32, i32, i32) {
    %c0_i32 = arith.constant 0 : i32
    %c0_i32_0 = arith.constant 0 : i32
    %c0_i32_1 = arith.constant 0 : i32
    return %arg1, %c0_i32, %c0_i32_0 : i32, i32, i32
  }
  func.func @transform_3(%arg0: i32, %arg1: i32) -> (i32, i32) {
    %c0_i32 = arith.constant 0 : i32
    %c0_i32_0 = arith.constant 0 : i32
    return %arg0, %c0_i32 : i32, i32
  }
}

</mosaic_0001>

<llo_original>
// kernel: tpu_custom_call.1
$region0: #{tpu_custom_call.1}
  #allocation0 [shape = 'u32[]', space=smem, size = 0x4, offset = 0x4, fixed_abs, tag = 'smem constant byte address 0x4 - core index']
  #allocation1 [shape = 'u32[144,128]{1,0:T(1,128)}', space=vmem, size = 0x12000, scoped, tag = 'internal scratch']
  #allocation2 [shape = 'f32[8,128]{1,0:T(8,128)}', space=vmem, size = 0x1000, scoped, tag = 'scratch operand']
  %s0 = inlined_call_operand.hbm [shape: f32[8,128], index: 0, kind: input, shape index: {}]
  %s1 = inlined_call_operand.hbm [shape: f32[3,128,128], index: 1, kind: input, shape index: {}]
  %s2 = inlined_call_operand.hbm [shape: f32[3,128,128], index: 2, kind: input, shape index: {}]
  %s3 = inlined_call_operand.hbm [shape: f32[8,128], index: 3, kind: output, shape index: {}]
  %s4 = sld [smem:[#allocation0]]
  $region65: #{tpu_custom_call.1} parent=0
    _
  %s6 = ssub.s32 1, %s4
  %s7 = scalar_select 0, %s6, %s4
  $region1: #{tpu_custom_call.1} parent=0
    #allocation3 [shape = 'u8[4096]{0}', space=vmem, size = 0x1000, scoped, tag = 'input window, operand 0, single buffered']
    #allocation4 [shape = 's32[2]{0}', space=sflag, size = 0x8, scoped, tag = 'scoped memory for tpu_custom_call.1']
    #allocation5 [shape = 's32[2]{0}', space=sflag, size = 0x8, scoped, tag = 'scoped memory for tpu_custom_call.1']
    #allocation6 [shape = 'u8[131072]{0}', space=vmem, size = 0x20000, scoped, tag = 'input window, operand 1']
    #allocation7 [shape = 's32[2]{0}', space=sflag, size = 0x8, scoped, tag = 'scoped memory for tpu_custom_call.1']
    #allocation8 [shape = 'u8[131072]{0}', space=vmem, size = 0x20000, scoped, tag = 'input window, operand 2']
    #allocation9 [shape = 'u8[4096]{0}', space=vmem, size = 0x1000, scoped, tag = 'output window, operand 0, single buffered']
    %8 = vsyncpa [#allocation4], 0
    %9 = vsyncpa [#allocation7], 0
    %s10 = scalar_lea.sflag [#allocation7], 1
    %11 = vsyncpa %s10, 0
    %12 = vsyncpa [#allocation5], 0
    loop: start=0, step=1, limit=5
    $region2: #{tpu_custom_call.1} parent=1 // loop_pre_header
      _
    $region3: #{tpu_custom_call.1} parent=1 // loop_header
      %s14 = sphi 0, %s18
      %p15 = scmp.ge.s32.totalorder %s14, 5
      %s21 = sphi 0, %s33
      %s22 = sphi 0, %s29
      %s23 = sphi 0, %s21
      %s24 = sphi 0, %s22
      %s25 = sphi 0, %s23
      %s26 = sphi 0, %s24
      %s36 = sphi 0, %s38
      %s39 = sphi 0, %s36
      %s40 = sphi 0, %s39
      %s56 = sphi 0, %s40
      %s62 = sphi 0, %s64
      %s65 = sphi 0, %s62
      %s66 = sphi 0, %s65
      %s82 = sphi 0, %s66
      %s88 = sphi 0, %s90
      %s91 = sphi 0, %s88
      %s92 = sphi 0, %s91
      %s108 = sphi 0, %s92
      %s114 = sphi 0, %s116
      %s117 = sphi 0, %s114
      %s118 = sphi 0, %s117
      %s134 = sphi 0, %s118
    $region4: #{tpu_custom_call.1} parent=1 // loop_header_branch
      %17 = sbr.rel (%p15) target = $region8
    $region5: #{tpu_custom_call.1} parent=1 // loop_body
      %s19 = ssub.s32 %s14, 1
      %s20 = ssub.s32 %s14, 2
      %s27 = sadd.s32 1, %s22
      %p28 = scmp.ge.s32.totalorder %s27, 3
      %s29 = scalar_select %p28, 0, %s27
      %s30 = sadd.s32 1, %s21
      %s31 = scalar_select %p28, %s30, %s21
      %p32 = scmp.ge.s32.totalorder %s31, 1
      %s33 = scalar_select %p32, 0, %s31
      %s34 = ssub.s32 %s21, %s33
      %p35 = scmp.eq.s32.totalorder %s34, 0
      %s37 = sadd.s32 %s36, 1
      %s38 = scalar_select %p35, %s36, %s37
      %p41 = pneg %p35
      %p42 = scmp.eq.s32.totalorder %s14, 2
      %p43 = por %p41, %p42
      %p44 = scmp.ne.s32.totalorder %s36, %s39
      %p45 = scmp.eq.s32.totalorder %s14, 0
      %p46 = por %p44, %p45
      %p47 = scmp.ne.s32.totalorder %s36, %s39
      %p48 = scmp.eq.s32.totalorder %s19, 2
      %p49 = por %p47, %p48
      %p50 = scmp.ne.s32.totalorder %s39, %s40
      %p51 = scmp.eq.s32.totalorder %s19, 0
      %p52 = por %p50, %p51
      %p53 = scmp.ne.s32.totalorder %s39, %s40
      %p54 = scmp.eq.s32.totalorder %s20, 2
      %p55 = por %p53, %p54
      %p57 = scmp.ne.s32.totalorder %s40, %s56
      %p58 = scmp.eq.s32.totalorder %s20, 0
      %p59 = por %p57, %p58
      %s60 = ssub.s32 %s22, %s29
      %p61 = scmp.eq.s32.totalorder %s60, 0
      %s63 = sadd.s32 %s62, 1
      %s64 = scalar_select %p61, %s62, %s63
      %p67 = pneg %p61
      %p68 = scmp.eq.s32.totalorder %s14, 2
      %p69 = por %p67, %p68
      %p70 = scmp.ne.s32.totalorder %s62, %s65
      %p71 = scmp.eq.s32.totalorder %s14, 0
      %p72 = por %p70, %p71
      %p73 = scmp.ne.s32.totalorder %s62, %s65
      %p74 = scmp.eq.s32.totalorder %s19, 2
      %p75 = por %p73, %p74
      %p76 = scmp.ne.s32.totalorder %s65, %s66
      %p77 = scmp.eq.s32.totalorder %s19, 0
      %p78 = por %p76, %p77
      %p79 = scmp.ne.s32.totalorder %s65, %s66
      %p80 = scmp.eq.s32.totalorder %s20, 2
      %p81 = por %p79, %p80
      %p83 = scmp.ne.s32.totalorder %s66, %s82
      %p84 = scmp.eq.s32.totalorder %s20, 0
      %p85 = por %p83, %p84
      %s86 = ssub.s32 %s22, %s29
      %p87 = scmp.eq.s32.totalorder %s86, 0
      %s89 = sadd.s32 %s88, 1
      %s90 = scalar_select %p87, %s88, %s89
      %p93 = pneg %p87
      %p94 = scmp.eq.s32.totalorder %s14, 2
      %p95 = por %p93, %p94
      %p96 = scmp.ne.s32.totalorder %s88, %s91
      %p97 = scmp.eq.s32.totalorder %s14, 0
      %p98 = por %p96, %p97
      %p99 = scmp.ne.s32.totalorder %s88, %s91
      %p100 = scmp.eq.s32.totalorder %s19, 2
      %p101 = por %p99, %p100
      %p102 = scmp.ne.s32.totalorder %s91, %s92
      %p103 = scmp.eq.s32.totalorder %s19, 0
      %p104 = por %p102, %p103
      %p105 = scmp.ne.s32.totalorder %s91, %s92
      %p106 = scmp.eq.s32.totalorder %s20, 2
      %p107 = por %p105, %p106
      %p109 = scmp.ne.s32.totalorder %s92, %s108
      %p110 = scmp.eq.s32.totalorder %s20, 0
      %p111 = por %p109, %p110
      %s112 = ssub.s32 %s21, %s33
      %p113 = scmp.eq.s32.totalorder %s112, 0
      %s115 = sadd.s32 %s114, 1
      %s116 = scalar_select %p113, %s114, %s115
      %p119 = pneg %p113
      %p120 = scmp.eq.s32.totalorder %s14, 2
      %p121 = por %p119, %p120
      %p122 = scmp.ne.s32.totalorder %s114, %s117
      %p123 = scmp.eq.s32.totalorder %s14, 0
      %p124 = por %p122, %p123
      %p125 = scmp.ne.s32.totalorder %s114, %s117
      %p126 = scmp.eq.s32.totalorder %s19, 2
      %p127 = por %p125, %p126
      %p128 = scmp.ne.s32.totalorder %s117, %s118
      %p129 = scmp.eq.s32.totalorder %s19, 0
      %p130 = por %p128, %p129
      %p131 = scmp.ne.s32.totalorder %s117, %s118
      %p132 = scmp.eq.s32.totalorder %s20, 2
      %p133 = por %p131, %p132
      %p135 = scmp.ne.s32.totalorder %s118, %s134
      %p136 = scmp.eq.s32.totalorder %s20, 0
      %p137 = por %p135, %p136
      %p138 = scmp.le.s32.totalorder 1, %s14
      %p139 = scmp.lt.s32.totalorder %s14, 4
      %p140 = pnand %p138, %p139
      %p141 = pneg %p140
      // Predicated region
      $region9: #{tpu_custom_call.1} parent=5 // pred_check
        _
      $region10: #{tpu_custom_call.1} parent=5 // pred_check_branch
        %143 = sbr.rel (%p140) target = $region12
      $region11: #{tpu_custom_call.1} parent=5 // pred_region
        %s144 = ssub.s32 %s14, 1
        // Predicated region
        $region13: #{tpu_custom_call.1} parent=11 // pred_check
          %p145 = pneg %p52
        $region14: #{tpu_custom_call.1} parent=11 // pred_check_branch
          %147 = sbr.rel (%p145) target = $region16
        $region15: #{tpu_custom_call.1} parent=11 // pred_region
          %s149 = ssub.s32 128, 128
          %150 = vsyncadd [#allocation4], %s149
          %s151 = smul.addr %s23, 128
          %s152 = scalar_lea.hbm %s0, %s151
          %s154 = sshll.u32 [#allocation3], 4
          %s155 = int_to_ptr.vmem [resolvable:$true] %s154
          %157 = dma.hbm_to_vmem [thread:$0]  %s152, 128, %s155, [#allocation4]
        $region16: #{tpu_custom_call.1} parent=11 // pred_fallthru
          _
      $region12: #{tpu_custom_call.1} parent=5 // pred_fallthru
        _
      %p158 = scmp.lt.s32.totalorder %s14, 3
      // Predicated region
      $region17: #{tpu_custom_call.1} parent=5 // pred_check
        %p159 = pneg %p158
      $region18: #{tpu_custom_call.1} parent=5 // pred_check_branch
        %161 = sbr.rel (%p159) target = $region20
      $region19: #{tpu_custom_call.1} parent=5 // pred_region
        // Predicated region
        $region21: #{tpu_custom_call.1} parent=19 // pred_check
          %p162 = pneg %p72
        $region22: #{tpu_custom_call.1} parent=19 // pred_check_branch
          %164 = sbr.rel (%p162) target = $region24
        $region23: #{tpu_custom_call.1} parent=19 // pred_region
          %s165 = sand.u32 %s14, 1
          %s166 = scalar_lea.sflag [#allocation7], %s165
          %s167 = sand.u32 %s62, 1
          %s168 = smul.addr %s167, 128
          %s169 = scalar_lea.vmem [#allocation6], %s168
          %s171 = ssub.s32 2048, 2048
          %172 = vsyncadd %s166, %s171
          %s173 = smul.addr %s22, 16
          %s174 = smul.addr %s173, 128
          %s175 = scalar_lea.hbm %s1, %s174
          %s176 = sshll.u32 %s169, 4
          %s177 = int_to_ptr.vmem [resolvable:$true] %s176
          %182 = dma.hbm_to_vmem [thread:$0]  %s175, 2048, %s177, %s166, 128, 128, 8
        $region24: #{tpu_custom_call.1} parent=19 // pred_fallthru
          _
        // Predicated region
        $region25: #{tpu_custom_call.1} parent=19 // pred_check
          %p183 = pneg %p98
        $region26: #{tpu_custom_call.1} parent=19 // pred_check_branch
          %185 = sbr.rel (%p183) target = $region28
        $region27: #{tpu_custom_call.1} parent=19 // pred_region
          %s186 = sand.u32 %s14, 1
          %s187 = scalar_lea.sflag [#allocation7], %s186
          %s188 = sand.u32 %s88, 1
          %s189 = smul.addr %s188, 128
          %s190 = scalar_lea.vmem [#allocation8], %s189
          %s192 = ssub.s32 2048, 2048
          %193 = vsyncadd %s187, %s192
          %s194 = smul.addr %s22, 16
          %s195 = smul.addr %s194, 128
          %s196 = scalar_lea.hbm %s2, %s195
          %s197 = sshll.u32 %s190, 4
          %s198 = int_to_ptr.vmem [resolvable:$true] %s197
          %203 = dma.hbm_to_vmem [thread:$0]  %s196, 2048, %s198, %s187, 128, 128, 8
        $region28: #{tpu_custom_call.1} parent=19 // pred_fallthru
          _
      $region20: #{tpu_custom_call.1} parent=5 // pred_fallthru
        _
      %p204 = scmp.le.s32.totalorder 1, %s14
      %p205 = scmp.lt.s32.totalorder %s14, 4
      %p206 = pnand %p204, %p205
      %p207 = pneg %p206
      // Predicated region
      $region29: #{tpu_custom_call.1} parent=5 // pred_check
        _
      $region30: #{tpu_custom_call.1} parent=5 // pred_check_branch
        %209 = sbr.rel (%p206) target = $region32
      $region31: #{tpu_custom_call.1} parent=5 // pred_region
        %s210 = ssub.s32 %s14, 1
        // Predicated region
        $region33: #{tpu_custom_call.1} parent=31 // pred_check
          %p211 = pneg %p52
        $region34: #{tpu_custom_call.1} parent=31 // pred_check_branch
          %213 = sbr.rel (%p211) target = $region36
        $region35: #{tpu_custom_call.1} parent=31 // pred_region
          %214 = dma.done [#allocation4], 128
        $region36: #{tpu_custom_call.1} parent=31 // pred_fallthru
          _
        %s215 = sand.u32 %s19, 1
        %s216 = scalar_lea.sflag [#allocation7], %s215
        %s217 = sand.u32 %s65, 1
        %s218 = smul.addr %s217, 128
        %s219 = scalar_lea.vmem [#allocation6], %s218
        // Predicated region
        $region37: #{tpu_custom_call.1} parent=31 // pred_check
          %p220 = pneg %p78
        $region38: #{tpu_custom_call.1} parent=31 // pred_check_branch
          %222 = sbr.rel (%p220) target = $region40
        $region39: #{tpu_custom_call.1} parent=31 // pred_region
          %223 = dma.done %s216, 2048
        $region40: #{tpu_custom_call.1} parent=31 // pred_fallthru
          _
        %s224 = sand.u32 %s19, 1
        %s225 = scalar_lea.sflag [#allocation7], %s224
        %s226 = sand.u32 %s91, 1
        %s227 = smul.addr %s226, 128
        %s228 = scalar_lea.vmem [#allocation8], %s227
        // Predicated region
        $region41: #{tpu_custom_call.1} parent=31 // pred_check
          %p229 = pneg %p104
        $region42: #{tpu_custom_call.1} parent=31 // pred_check_branch
          %231 = sbr.rel (%p229) target = $region44
        $region43: #{tpu_custom_call.1} parent=31 // pred_region
          %232 = dma.done %s225, 2048
        $region44: #{tpu_custom_call.1} parent=31 // pred_fallthru
          _
        %p233 = pneg %p52
        %p234 = pneg %p49
        %s235 = sand.u32 %s19, 1
        %s236 = scalar_lea.sflag [#allocation7], %s235
        %s237 = sand.u32 %s65, 1
        %s238 = smul.addr %s237, 128
        %s239 = scalar_lea.vmem [#allocation6], %s238
        %p240 = pneg %p78
        %p241 = pneg %p75
        %s242 = sand.u32 %s19, 1
        %s243 = scalar_lea.sflag [#allocation7], %s242
        %s244 = sand.u32 %s91, 1
        %s245 = smul.addr %s244, 128
        %s246 = scalar_lea.vmem [#allocation8], %s245
        %p247 = pneg %p104
        %p248 = pneg %p101
        %p249 = pneg %p130
        %p250 = pneg %p127
        %p251 = scmp.eq.s32.totalorder %s24, 0
        // Predicated region
        $region45: #{tpu_custom_call.1} parent=31 // pred_check
          %p252 = pneg %p251
        $region46: #{tpu_custom_call.1} parent=31 // pred_check_branch
          %254 = sbr.rel (%p252) target = $region48
        $region47: #{tpu_custom_call.1} parent=31 // pred_region
          %v255 = vld [vmem:[#allocation3] sm:$0xff]
          %256 = vst [vmem:[#allocation2] sm:$0xff] %v255
        $region48: #{tpu_custom_call.1} parent=31 // pred_fallthru
          _
        %v257 = vld [vmem:[%s219] sm:$0xff]
        %v258 = vld [vmem:[%s219 + $0x8] sm:$0xff]
        %v259 = vld [vmem:[%s219 + $0x10] sm:$0xff]
        %v260 = vld [vmem:[%s219 + $0x18] sm:$0xff]
        %v261 = vld [vmem:[%s219 + $0x20] sm:$0xff]
        %v262 = vld [vmem:[%s219 + $0x28] sm:$0xff]
        %v263 = vld [vmem:[%s219 + $0x30] sm:$0xff]
        %v264 = vld [vmem:[%s219 + $0x38] sm:$0xff]
        %v265 = vld [vmem:[%s219 + $0x40] sm:$0xff]
        %v266 = vld [vmem:[%s219 + $0x48] sm:$0xff]
        %v267 = vld [vmem:[%s219 + $0x50] sm:$0xff]
        %v268 = vld [vmem:[%s219 + $0x58] sm:$0xff]
        %v269 = vld [vmem:[%s219 + $0x60] sm:$0xff]
        %v270 = vld [vmem:[%s219 + $0x68] sm:$0xff]
        %v271 = vld [vmem:[%s219 + $0x70] sm:$0xff]
        %v272 = vld [vmem:[%s219 + $0x78] sm:$0xff]
        %v273 = vld [vmem:[%s228] sm:$0xff]
        %v274 = vld [vmem:[%s228 + $0x8] sm:$0xff]
        %v275 = vld [vmem:[%s228 + $0x10] sm:$0xff]
        %v276 = vld [vmem:[%s228 + $0x18] sm:$0xff]
        %v277 = vld [vmem:[%s228 + $0x20] sm:$0xff]
        %v278 = vld [vmem:[%s228 + $0x28] sm:$0xff]
        %v279 = vld [vmem:[%s228 + $0x30] sm:$0xff]
        %v280 = vld [vmem:[%s228 + $0x38] sm:$0xff]
        %v281 = vld [vmem:[%s228 + $0x40] sm:$0xff]
        %v282 = vld [vmem:[%s228 + $0x48] sm:$0xff]
        %v283 = vld [vmem:[%s228 + $0x50] sm:$0xff]
        %v284 = vld [vmem:[%s228 + $0x58] sm:$0xff]
        %v285 = vld [vmem:[%s228 + $0x60] sm:$0xff]
        %v286 = vld [vmem:[%s228 + $0x68] sm:$0xff]
        %v287 = vld [vmem:[%s228 + $0x70] sm:$0xff]
        %v288 = vld [vmem:[%s228 + $0x78] sm:$0xff]
        %v289 = vtanh.pop %v257
        %v290 = vtanh.pop %v258
        %v291 = vtanh.pop %v259
        %v292 = vtanh.pop %v260
        %v293 = vtanh.pop %v261
        %v294 = vtanh.pop %v262
        %v295 = vtanh.pop %v263
        %v296 = vtanh.pop %v264
        %v297 = vtanh.pop %v265
        %v298 = vtanh.pop %v266
        %v299 = vtanh.pop %v267
        %v300 = vtanh.pop %v268
        %v301 = vtanh.pop %v269
        %v302 = vtanh.pop %v270
        %v303 = vtanh.pop %v271
        %v304 = vtanh.pop %v272
        %v305 = vmul.f32 %v273, 0.5
        %v306 = vmul.f32 %v274, 0.5
        %v307 = vmul.f32 %v275, 0.5
        %v308 = vmul.f32 %v276, 0.5
        %v309 = vmul.f32 %v277, 0.5
        %v310 = vmul.f32 %v278, 0.5
        %v311 = vmul.f32 %v279, 0.5
        %v312 = vmul.f32 %v280, 0.5
        %v313 = vmul.f32 %v281, 0.5
        %v314 = vmul.f32 %v282, 0.5
        %v315 = vmul.f32 %v283, 0.5
        %v316 = vmul.f32 %v284, 0.5
        %v317 = vmul.f32 %v285, 0.5
        %v318 = vmul.f32 %v286, 0.5
        %v319 = vmul.f32 %v287, 0.5
        %v320 = vmul.f32 %v288, 0.5
        %v321 = vtanh.pop %v305
        %v322 = vtanh.pop %v306
        %v323 = vtanh.pop %v307
        %v324 = vtanh.pop %v308
        %v325 = vtanh.pop %v309
        %v326 = vtanh.pop %v310
        %v327 = vtanh.pop %v311
        %v328 = vtanh.pop %v312
        %v329 = vtanh.pop %v313
        %v330 = vtanh.pop %v314
        %v331 = vtanh.pop %v315
        %v332 = vtanh.pop %v316
        %v333 = vtanh.pop %v317
        %v334 = vtanh.pop %v318
        %v335 = vtanh.pop %v319
        %v336 = vtanh.pop %v320
        %v337 = vmul.f32 %v321, 0.5
        %v338 = vmul.f32 %v322, 0.5
        %v339 = vmul.f32 %v323, 0.5
        %v340 = vmul.f32 %v324, 0.5
        %v341 = vmul.f32 %v325, 0.5
        %v342 = vmul.f32 %v326, 0.5
        %v343 = vmul.f32 %v327, 0.5
        %v344 = vmul.f32 %v328, 0.5
        %v345 = vmul.f32 %v329, 0.5
        %v346 = vmul.f32 %v330, 0.5
        %v347 = vmul.f32 %v331, 0.5
        %v348 = vmul.f32 %v332, 0.5
        %v349 = vmul.f32 %v333, 0.5
        %v350 = vmul.f32 %v334, 0.5
        %v351 = vmul.f32 %v335, 0.5
        %v352 = vmul.f32 %v336, 0.5
        %v353 = vadd.f32 %v337, 0.5
        %v354 = vadd.f32 %v338, 0.5
        %v355 = vadd.f32 %v339, 0.5
        %v356 = vadd.f32 %v340, 0.5
        %v357 = vadd.f32 %v341, 0.5
        %v358 = vadd.f32 %v342, 0.5
        %v359 = vadd.f32 %v343, 0.5
        %v360 = vadd.f32 %v344, 0.5
        %v361 = vadd.f32 %v345, 0.5
        %v362 = vadd.f32 %v346, 0.5
        %v363 = vadd.f32 %v347, 0.5
        %v364 = vadd.f32 %v348, 0.5
        %v365 = vadd.f32 %v349, 0.5
        %v366 = vadd.f32 %v350, 0.5
        %v367 = vadd.f32 %v351, 0.5
        %v368 = vadd.f32 %v352, 0.5
        %v369 = vmul.f32 %v289, %v353
        %v370 = vmul.f32 %v290, %v354
        %v371 = vmul.f32 %v291, %v355
        %v372 = vmul.f32 %v292, %v356
        %v373 = vmul.f32 %v293, %v357
        %v374 = vmul.f32 %v294, %v358
        %v375 = vmul.f32 %v295, %v359
        %v376 = vmul.f32 %v296, %v360
        %v377 = vmul.f32 %v297, %v361
        %v378 = vmul.f32 %v298, %v362
        %v379 = vmul.f32 %v299, %v363
        %v380 = vmul.f32 %v300, %v364
        %v381 = vmul.f32 %v301, %v365
        %v382 = vmul.f32 %v302, %v366
        %v383 = vmul.f32 %v303, %v367
        %v384 = vmul.f32 %v304, %v368
        %v385 = vld [vmem:[#allocation2] sm:$0xff]
        %386 = vmatprep.subr.mxu0 0.0
        %387 = vmatpush1.msra.mxu0 %v369
        %388 = vmatprep.subr.mxu0 0.0
        %389 = vmatpush1.msra.mxu0 %v370
        %390 = vmatprep.subr.mxu0 0.0
        %391 = vmatpush1.msra.mxu0 %v371
        %392 = vmatprep.subr.mxu0 0.0
        %393 = vmatpush1.msra.mxu0 %v372
        %394 = vmatprep.subr.mxu0 0.0
        %395 = vmatpush1.msra.mxu0 %v373
        %396 = vmatprep.subr.mxu0 0.0
        %397 = vmatpush1.msra.mxu0 %v374
        %398 = vmatprep.subr.mxu0 0.0
        %399 = vmatpush1.msra.mxu0 %v375
        %400 = vmatprep.subr.mxu0 0.0
        %401 = vmatpush1.msra.mxu0 %v376
        %402 = vmatprep.subr.mxu0 0.0
        %403 = vmatpush1.msra.mxu0 %v377
        %404 = vmatprep.subr.mxu0 0.0
        %405 = vmatpush1.msra.mxu0 %v378
        %406 = vmatprep.subr.mxu0 0.0
        %407 = vmatpush1.msra.mxu0 %v379
        %408 = vmatprep.subr.mxu0 0.0
        %409 = vmatpush1.msra.mxu0 %v380
        %410 = vmatprep.subr.mxu0 0.0
        %411 = vmatpush1.msra.mxu0 %v381
        %412 = vmatprep.subr.mxu0 0.0
        %413 = vmatpush1.msra.mxu0 %v382
        %414 = vmatprep.subr.mxu0 0.0
        %415 = vmatpush1.msra.mxu0 %v383
        %416 = vmatprep.subr.mxu0 0.0
        %417 = vmatpush1.msra.mxu0 %v384
        %418 = vmatprep.subr.mxu0 0.0
        %419 = vmatpush1.msra.mxu0 0.0
        %420 = vmatprep.subr.mxu0 0.0
        %421 = vmatpush1.msra.mxu0 0.0
        %422 = vmatprep.subr.mxu0 0.0
        %423 = vmatpush1.msra.mxu0 0.0
        %424 = vmatprep.subr.mxu0 0.0
        %425 = vmatpush1.msra.mxu0 0.0
        %426 = vmatprep.subr.mxu0 0.0
        %427 = vmatpush1.msra.mxu0 0.0
        %428 = vmatprep.subr.mxu0 0.0
        %429 = vmatpush1.msra.mxu0 0.0
        %430 = vmatprep.subr.mxu0 0.0
        %431 = vmatpush1.msra.mxu0 0.0
        %432 = vmatprep.subr.mxu0 0.0
        %433 = vmatpush1.msra.mxu0 0.0
        %434 = vmatprep.subr.mxu0 0.0
        %435 = vmatpush1.msra.mxu0 0.0
        %436 = vmatprep.subr.mxu0 0.0
        %437 = vmatpush1.msra.mxu0 0.0
        %438 = vmatprep.subr.mxu0 0.0
        %439 = vmatpush1.msra.mxu0 0.0
        %440 = vmatprep.subr.mxu0 0.0
        %441 = vmatpush1.msra.mxu0 0.0
        %442 = vmatprep.subr.mxu0 0.0
        %443 = vmatpush1.msra.mxu0 0.0
        %444 = vmatprep.subr.mxu0 0.0
        %445 = vmatpush1.msra.mxu0 0.0
        %446 = vmatprep.subr.mxu0 0.0
        %447 = vmatpush1.msra.mxu0 0.0
        %448 = vmatprep.subr.mxu0 0.0
        %449 = vmatpush1.msra.mxu0 0.0
        %450 = vmatprep.mubr.f32.mxu0 0.0
        %451 = vmatmul.mubr.f32.gmra.mrb[0].mxu0 %v385
        %v452 = vpop.f32.mrb[0].mxu0
        %v453 = vadd.f32 0.0, %v452
        %v454 = vpop.f32.mrb[0].mxu0
        %455 = vdwg.mxu0
        %456 = vst [vmem:[#allocation2] sm:$0xff] %v453
        %p457 = scmp.eq.s32.totalorder %s24, 2
        // Predicated region
        $region49: #{tpu_custom_call.1} parent=31 // pred_check
          %p458 = pneg %p457
        $region50: #{tpu_custom_call.1} parent=31 // pred_check_branch
          %460 = sbr.rel (%p458) target = $region52
        $region51: #{tpu_custom_call.1} parent=31 // pred_region
          %461 = vst [vmem:[#allocation9] sm:$0xff] %v453
        $region52: #{tpu_custom_call.1} parent=31 // pred_fallthru
          _
        // Predicated region
        $region53: #{tpu_custom_call.1} parent=31 // pred_check
          %p462 = pneg %p127
        $region54: #{tpu_custom_call.1} parent=31 // pred_check_branch
          %464 = sbr.rel (%p462) target = $region56
        $region55: #{tpu_custom_call.1} parent=31 // pred_region
          %s466 = ssub.s32 128, 128
          %467 = vsyncadd [#allocation5], %s466
          %s468 = smul.addr %s23, 128
          %s469 = scalar_lea.hbm %s3, %s468
          %s471 = sshll.u32 [#allocation9], 4
          %s472 = int_to_ptr.vmem [resolvable:$true] %s471
          %474 = dma.vmem_to_hbm [thread:$0]  %s472, 128, %s469, [#allocation5]
        $region56: #{tpu_custom_call.1} parent=31 // pred_fallthru
          _
        // Predicated region
        $region57: #{tpu_custom_call.1} parent=31 // pred_check
          %p475 = pneg %p127
        $region58: #{tpu_custom_call.1} parent=31 // pred_check_branch
          %477 = sbr.rel (%p475) target = $region60
        $region59: #{tpu_custom_call.1} parent=31 // pred_region
          %478 = dma.done [#allocation5], 128
        $region60: #{tpu_custom_call.1} parent=31 // pred_fallthru
          _
      $region32: #{tpu_custom_call.1} parent=5 // pred_fallthru
        _
      %p479 = scmp.le.s32.totalorder 2, %s14
      // Predicated region
      $region61: #{tpu_custom_call.1} parent=5 // pred_check
        %p480 = pneg %p479
      $region62: #{tpu_custom_call.1} parent=5 // pred_check_branch
        %482 = sbr.rel (%p480) target = $region64
      $region63: #{tpu_custom_call.1} parent=5 // pred_region
        %s483 = ssub.s32 %s14, 2
      $region64: #{tpu_custom_call.1} parent=5 // pred_fallthru
        _
    $region6: #{tpu_custom_call.1} parent=1 // loop_footer
      %s18 = sadd.s32 1, %s14
    $region7: #{tpu_custom_call.1} parent=1 // loop_footer_branch
      %13 = sbr.rel target = $region3
    $region8: #{tpu_custom_call.1} parent=1 // loop_exit
      _
    %484 = vsyncpa [#allocation4], 1
    %s485 = scalar_lea.sflag [#allocation4], 1
    %486 = vsyncpa %s485, 1
    %487 = vsyncpa [#allocation7], 1
    %s488 = scalar_lea.sflag [#allocation7], 1
    %489 = vsyncpa %s488, 1
    %490 = vsyncpa [#allocation5], 1
    %s491 = scalar_lea.sflag [#allocation5], 1
    %492 = vsyncpa %s491, 1

</llo_original>
